<compile_context>
chip_gen: v7x
topology: tpu7x:2x2x1
jax: 0.10.0
libtpu: 0.0.40
codegen_flags: <defaults>
</compile_context>

<pallas_src>
import jax
import jax.numpy as jnp
from jax.experimental import pallas as pl
from jax.experimental.pallas import tpu as pltpu

K = 5           # Conv2d kernel_size == stride (no bias, 1 in / 1 out channel)
KK = K * K      # 25 taps == 25 output positions per image


def _filter_kernel(w_ref, p_ref, o_ref):
    # w_ref: (25, 1)       flattened 5x5 kernel, pre-scaled by 1/25 (taps on sublanes)
    # p_ref: (25, Bt*25)   taps x (batch * output-position), lane-dense
    # o_ref: (1,  Bt*25)   filtered outputs, lane-dense
    prod = p_ref[...] * w_ref[...]                        # VPU, broadcast over lanes
    o_ref[...] = jnp.sum(prod, axis=0, keepdims=True).astype(o_ref.dtype)  # XLU sublane reduce


def _round_up(x, m):
    return -(-x // m) * m


def filter_forward(depth, weight, *, batch_tile=4096):
    """Pallas implementation of Filter.forward.

    depth:  (B, 1, H, W) float32, H >= 34, W >= 38
    weight: (1, 1, 5, 5) float32 (Conv2d weight, no bias)
    returns (B, 1, 5, 5) float32  ==  conv(depth[:, :, 9:34, 13:38]) / 25
    """
    assert batch_tile % 128 == 0
    B = depth.shape[0]

    # ---- batch tiling ---------------------------------------------------------
    # Bt must be a multiple of 128 so the lane axis Bt*25 is a multiple of 128
    # (25 and 128 are coprime).  Use >= 2 tiles whenever B > 128 so the "parallel"
    # grid axis can shard across the 2 v7x TensorCores (harmless 2-step loop on
    # single-TC v5e/v6e).
    n_tiles = pl.cdiv(B, batch_tile)
    if n_tiles == 1 and B > 128:
        n_tiles = 2
    Bt = _round_up(pl.cdiv(B, n_tiles), 128)
    B_pad = n_tiles * Bt
    n_blk = Bt * KK                                       # lane width per block, % 128 == 0

    # ---- XLA glue: crop + batch zero-pad + im2col (stride == kernel -> pure reshape)
    # Pad BEFORE the transpose so slice+pad+reshape+transpose stays one producer
    # fusion; allow_input_fusion below lets XLA fuse it into the Pallas operand so
    # P does not have to be materialized in HBM.
    crop = depth[:, 0, 9:9 + KK, 13:13 + KK]              # (B, 25, 25)
    if B_pad != B:
        crop = jnp.pad(crop, ((0, B_pad - B), (0, 0), (0, 0)))
    patches = crop.reshape(B_pad, K, K, K, K)             # (B, oh, kh, ow, kw)
    patches = patches.transpose(0, 1, 3, 2, 4)            # (B, oh, ow, kh, kw)
    patches = patches.reshape(B_pad, KK, KK)              # (B, out-pos, taps)
    P = patches.transpose(2, 0, 1).reshape(KK, B_pad * KK)  # (25, B_pad*25), lane-dense

    # fold the 1/(K*K) scale into the tiny weight column (25 floats)
    w_col = (weight.reshape(KK, 1) * (1.0 / KK)).astype(depth.dtype)

    out = pl.pallas_call(
        _filter_kernel,
        out_shape=jax.ShapeDtypeStruct((1, B_pad * KK), depth.dtype),
        grid=(n_tiles,),
        in_specs=[
            pl.BlockSpec((KK, 1), lambda i: (0, 0)),       # weight: resident, loaded once
            pl.BlockSpec((KK, n_blk), lambda i: (0, i)),   # lane-dense batch tile
        ],
        out_specs=pl.BlockSpec((1, n_blk), lambda i: (0, i)),
        compiler_params=pltpu.CompilerParams(
            dimension_semantics=("parallel",),             # megacore sharding on v7x
            allow_input_fusion=[False, True],              # fuse crop/pad/im2col producer
            vmem_limit_bytes=48 * 1024 * 1024,             # explicit: fits v7x 64 MiB
        ),
    )(w_col, P)

    # drop batch padding, restore (B, 1, 5, 5); column index = b*25 + (oh*5 + ow)
    return out[0, : B * KK].reshape(B, 1, K, K)


if __name__ == "__main__":
    key = jax.random.PRNGKey(0)
    k_depth, k_w = jax.random.split(key)

    # small shapes consistent with the forward pass (needs H >= 34, W >= 38)
    depth = jax.random.uniform(k_depth, (2, 1, 40, 40), dtype=jnp.float32)

    # deterministic Conv2d-style init: U(-1/sqrt(fan_in), 1/sqrt(fan_in)), fan_in = 25
    bound = 1.0 / (K * K) ** 0.5
    weight = jax.random.uniform(
        k_w, (1, 1, K, K), dtype=jnp.float32, minval=-bound, maxval=bound
    )

    out = jax.block_until_ready(filter_forward(depth, weight))

    # reference check against XLA conv (same semantics as the PyTorch module)
    crop = depth[:, :, 9:34, 13:38]
    ref = jax.lax.conv_general_dilated(
        crop, weight, window_strides=(K, K), padding="VALID"
    ) / (K * K)
    assert out.shape == (2, 1, 5, 5)
    assert jnp.allclose(out, ref, atol=1e-5)

    print("KERNEL_OK")
</pallas_src>

<mosaic_0001>
module attributes {stable_mosaic.version = 11 : i64} {
  func.func @_filter_kernel(%arg0: i32, %arg1: memref<25x1xf32, #tpu.memory_space<vmem>>, %arg2: memref<25x3200xf32, #tpu.memory_space<vmem>>, %arg3: memref<1x3200xf32, #tpu.memory_space<vmem>>) attributes {dimension_semantics = [#tpu.dimension_semantics<parallel>], iteration_bounds = array<i64: 1>, scalar_prefetch = 0 : i64, scratch_operands = 0 : i64, tpu.core_type = #tpu.core_type<tc>, window_params = [{pipeline_mode = #tpu.pipeline_mode<synchronous>, transform_indices = @transform_0, window_bounds = array<i64: 25, 1>}, {transform_indices = @transform_1, window_bounds = array<i64: 25, 3200>}, {transform_indices = @transform_2, window_bounds = array<i64: 1, 3200>}]} {
    %c0 = arith.constant 0 : index
    %c0_0 = arith.constant 0 : index
    %0 = vector.load %arg2[%c0, %c0_0] : memref<25x3200xf32, #tpu.memory_space<vmem>>, vector<25x3200xf32>
    %c0_1 = arith.constant 0 : index
    %c0_2 = arith.constant 0 : index
    %1 = vector.load %arg1[%c0_1, %c0_2] : memref<25x1xf32, #tpu.memory_space<vmem>>, vector<25x1xf32>
    %2 = vector.broadcast %1 : vector<25x1xf32> to vector<25x3200xf32>
    %3 = arith.mulf %0, %2 : vector<25x3200xf32>
    %cst = arith.constant dense<0.000000e+00> : vector<3200xf32>
    %4 = vector.multi_reduction <add>, %3, %cst [0] : vector<25x3200xf32> to vector<3200xf32>
    %5 = vector.shape_cast %4 : vector<3200xf32> to vector<1x3200xf32>
    %c0_3 = arith.constant 0 : index
    %c0_4 = arith.constant 0 : index
    %6 = vector.load %arg3[%c0_3, %c0_4] : memref<1x3200xf32, #tpu.memory_space<vmem>>, vector<1x3200xf32>
    tpu.vector_store %arg3[%c0_3, %c0_4], %5 {strides = array<i32>} : memref<1x3200xf32, #tpu.memory_space<vmem>>, vector<1x3200xf32>,
    return
  }
  func.func @transform_0(%arg0: i32) -> (i32, i32) {
    %c0_i32 = arith.constant 0 : i32
    %c0_i32_0 = arith.constant 0 : i32
    %c0_i32_1 = arith.constant 0 : i32
    return %c0_i32, %c0_i32_0 : i32, i32
  }
  func.func @transform_1(%arg0: i32) -> (i32, i32) {
    %c0_i32 = arith.constant 0 : i32
    %c0_i32_0 = arith.constant 0 : i32
    return %c0_i32, %arg0 : i32, i32
  }
  func.func @transform_2(%arg0: i32) -> (i32, i32) {
    %c0_i32 = arith.constant 0 : i32
    %c0_i32_0 = arith.constant 0 : i32
    return %c0_i32, %arg0 : i32, i32
  }
}

</mosaic_0001>

<llo_original>
// kernel: tpu_custom_call.1
$region0: #{tpu_custom_call.1}
  #allocation0 [shape = 'u32[]', space=smem, size = 0x4, offset = 0x4, fixed_abs, tag = 'smem constant byte address 0x4 - core index']
  #allocation1 [shape = 'u32[144,128]{1,0:T(1,128)}', space=vmem, size = 0x12000, scoped, tag = 'internal scratch']
  %s0 = inlined_call_operand.vmem [shape: f32[25,1], index: 0, kind: input, shape index: {}]
  %s1 = inlined_call_operand.hbm [shape: f32[25,3200], index: 1, kind: input, shape index: {}]
  %s2 = inlined_call_operand.hbm [shape: f32[1,3200], index: 2, kind: output, shape index: {}]
  %s3 = sld [smem:[#allocation0]]
  $region22: #{tpu_custom_call.1} parent=0
    _
  %s5 = ssub.s32 1, %s3
  %s6 = scalar_select 0, %s5, %s3
  $region1: #{tpu_custom_call.1} parent=0
    #allocation2 [shape = 'u8[409600]{0}', space=vmem, size = 0x64000, scoped, tag = 'input window, operand 1, single buffered']
    #allocation3 [shape = 's32[1]{0}', space=sflag, size = 0x4, scoped, tag = 'scoped memory for tpu_custom_call.1']
    #allocation4 [shape = 's32[1]{0}', space=sflag, size = 0x4, scoped, tag = 'scoped memory for tpu_custom_call.1']
    #allocation5 [shape = 'u8[12800]{0}', space=vmem, size = 0x3400, scoped, tag = 'output window, operand 0, single buffered']
    %7 = vsyncpa [#allocation3], 0
    %8 = vsyncpa [#allocation4], 0
    // Predicated region
    $region2: #{tpu_custom_call.1} parent=1 // pred_check
      _
    $region3: #{tpu_custom_call.1} parent=1 // pred_check_branch
      %10 = sbr.rel (0) target = $region5
    $region4: #{tpu_custom_call.1} parent=1 // pred_region
      _
    $region5: #{tpu_custom_call.1} parent=1 // pred_fallthru
      _
    // Predicated region
    $region6: #{tpu_custom_call.1} parent=1 // pred_check
      _
    $region7: #{tpu_custom_call.1} parent=1 // pred_check_branch
      %12 = sbr.rel (0) target = $region9
    $region8: #{tpu_custom_call.1} parent=1 // pred_region
      %s14 = ssub.s32 12800, 12800
      %15 = vsyncadd [#allocation3], %s14
      %s16 = sshll.u32 [#allocation2], 4
      %s17 = int_to_ptr.vmem [resolvable:$true] %s16
      %22 = dma.hbm_to_vmem [thread:$0]  %s1, 12800, %s17, [#allocation3], 3200, 3200, 200
    $region9: #{tpu_custom_call.1} parent=1 // pred_fallthru
      _
    // Predicated region
    $region10: #{tpu_custom_call.1} parent=1 // pred_check
      _
    $region11: #{tpu_custom_call.1} parent=1 // pred_check_branch
      %24 = sbr.rel (0) target = $region13
    $region12: #{tpu_custom_call.1} parent=1 // pred_region
      %25 = dma.done [#allocation3], 12800
    $region13: #{tpu_custom_call.1} parent=1 // pred_fallthru
      _
    %v26 = vld [vmem:[#allocation2] sm:$0xff]
    %v27 = vld [vmem:[#allocation2 + $0x8] sm:$0xff]
    %v28 = vld [vmem:[#allocation2 + $0x10] sm:$0xff]
    %v29 = vld [vmem:[#allocation2 + $0x18] sm:$0xff]
    %v30 = vld [vmem:[#allocation2 + $0x20] sm:$0xff]
    %v31 = vld [vmem:[#allocation2 + $0x28] sm:$0xff]
    %v32 = vld [vmem:[#allocation2 + $0x30] sm:$0xff]
    %v33 = vld [vmem:[#allocation2 + $0x38] sm:$0xff]
    %v34 = vld [vmem:[#allocation2 + $0x40] sm:$0xff]
    %v35 = vld [vmem:[#allocation2 + $0x48] sm:$0xff]
    %v36 = vld [vmem:[#allocation2 + $0x50] sm:$0xff]
    %v37 = vld [vmem:[#allocation2 + $0x58] sm:$0xff]
    %v38 = vld [vmem:[#allocation2 + $0x60] sm:$0xff]
    %v39 = vld [vmem:[#allocation2 + $0x68] sm:$0xff]
    %v40 = vld [vmem:[#allocation2 + $0x70] sm:$0xff]
    %v41 = vld [vmem:[#allocation2 + $0x78] sm:$0xff]
    %v42 = vld [vmem:[#allocation2 + $0x80] sm:$0xff]
    %v43 = vld [vmem:[#allocation2 + $0x88] sm:$0xff]
    %v44 = vld [vmem:[#allocation2 + $0x90] sm:$0xff]
    %v45 = vld [vmem:[#allocation2 + $0x98] sm:$0xff]
    %v46 = vld [vmem:[#allocation2 + $0xa0] sm:$0xff]
    %v47 = vld [vmem:[#allocation2 + $0xa8] sm:$0xff]
    %v48 = vld [vmem:[#allocation2 + $0xb0] sm:$0xff]
    %v49 = vld [vmem:[#allocation2 + $0xb8] sm:$0xff]
    %v50 = vld [vmem:[#allocation2 + $0xc0] sm:$0xff]
    %v51 = vld [vmem:[#allocation2 + $0xc8] sm:$0xff]
    %v52 = vld [vmem:[#allocation2 + $0xd0] sm:$0xff]
    %v53 = vld [vmem:[#allocation2 + $0xd8] sm:$0xff]
    %v54 = vld [vmem:[#allocation2 + $0xe0] sm:$0xff]
    %v55 = vld [vmem:[#allocation2 + $0xe8] sm:$0xff]
    %v56 = vld [vmem:[#allocation2 + $0xf0] sm:$0xff]
    %v57 = vld [vmem:[#allocation2 + $0xf8] sm:$0xff]
    %v58 = vld [vmem:[#allocation2 + $0x100] sm:$0xff]
    %v59 = vld [vmem:[#allocation2 + $0x108] sm:$0xff]
    %v60 = vld [vmem:[#allocation2 + $0x110] sm:$0xff]
    %v61 = vld [vmem:[#allocation2 + $0x118] sm:$0xff]
    %v62 = vld [vmem:[#allocation2 + $0x120] sm:$0xff]
    %v63 = vld [vmem:[#allocation2 + $0x128] sm:$0xff]
    %v64 = vld [vmem:[#allocation2 + $0x130] sm:$0xff]
    %v65 = vld [vmem:[#allocation2 + $0x138] sm:$0xff]
    %v66 = vld [vmem:[#allocation2 + $0x140] sm:$0xff]
    %v67 = vld [vmem:[#allocation2 + $0x148] sm:$0xff]
    %v68 = vld [vmem:[#allocation2 + $0x150] sm:$0xff]
    %v69 = vld [vmem:[#allocation2 + $0x158] sm:$0xff]
    %v70 = vld [vmem:[#allocation2 + $0x160] sm:$0xff]
    %v71 = vld [vmem:[#allocation2 + $0x168] sm:$0xff]
    %v72 = vld [vmem:[#allocation2 + $0x170] sm:$0xff]
    %v73 = vld [vmem:[#allocation2 + $0x178] sm:$0xff]
    %v74 = vld [vmem:[#allocation2 + $0x180] sm:$0xff]
    %v75 = vld [vmem:[#allocation2 + $0x188] sm:$0xff]
    %v76 = vld [vmem:[#allocation2 + $0x190] sm:$0xff]
    %v77 = vld [vmem:[#allocation2 + $0x198] sm:$0xff]
    %v78 = vld [vmem:[#allocation2 + $0x1a0] sm:$0xff]
    %v79 = vld [vmem:[#allocation2 + $0x1a8] sm:$0xff]
    %v80 = vld [vmem:[#allocation2 + $0x1b0] sm:$0xff]
    %v81 = vld [vmem:[#allocation2 + $0x1b8] sm:$0xff]
    %v82 = vld [vmem:[#allocation2 + $0x1c0] sm:$0xff]
    %v83 = vld [vmem:[#allocation2 + $0x1c8] sm:$0xff]
    %v84 = vld [vmem:[#allocation2 + $0x1d0] sm:$0xff]
    %v85 = vld [vmem:[#allocation2 + $0x1d8] sm:$0xff]
    %v86 = vld [vmem:[#allocation2 + $0x1e0] sm:$0xff]
    %v87 = vld [vmem:[#allocation2 + $0x1e8] sm:$0xff]
    %v88 = vld [vmem:[#allocation2 + $0x1f0] sm:$0xff]
    %v89 = vld [vmem:[#allocation2 + $0x1f8] sm:$0xff]
    %v90 = vld [vmem:[#allocation2 + $0x200] sm:$0xff]
    %v91 = vld [vmem:[#allocation2 + $0x208] sm:$0xff]
    %v92 = vld [vmem:[#allocation2 + $0x210] sm:$0xff]
    %v93 = vld [vmem:[#allocation2 + $0x218] sm:$0xff]
    %v94 = vld [vmem:[#allocation2 + $0x220] sm:$0xff]
    %v95 = vld [vmem:[#allocation2 + $0x228] sm:$0xff]
    %v96 = vld [vmem:[#allocation2 + $0x230] sm:$0xff]
    %v97 = vld [vmem:[#allocation2 + $0x238] sm:$0xff]
    %v98 = vld [vmem:[#allocation2 + $0x240] sm:$0xff]
    %v99 = vld [vmem:[#allocation2 + $0x248] sm:$0xff]
    %v100 = vld [vmem:[#allocation2 + $0x250] sm:$0xff]
    %v101 = vld [vmem:[#allocation2 + $0x258] sm:$0x1]
    %v102 = vld [vmem:[#allocation2 + $0x260] sm:$0x1]
    %v103 = vld [vmem:[#allocation2 + $0x268] sm:$0x1]
    %v104 = vld [vmem:[#allocation2 + $0x270] sm:$0x1]
    %v105 = vld [vmem:[#allocation2 + $0x278] sm:$0x1]
    %v106 = vld [vmem:[#allocation2 + $0x280] sm:$0x1]
    %v107 = vld [vmem:[#allocation2 + $0x288] sm:$0x1]
    %v108 = vld [vmem:[#allocation2 + $0x290] sm:$0x1]
    %v109 = vld [vmem:[#allocation2 + $0x298] sm:$0x1]
    %v110 = vld [vmem:[#allocation2 + $0x2a0] sm:$0x1]
    %v111 = vld [vmem:[#allocation2 + $0x2a8] sm:$0x1]
    %v112 = vld [vmem:[#allocation2 + $0x2b0] sm:$0x1]
    %v113 = vld [vmem:[#allocation2 + $0x2b8] sm:$0x1]
    %v114 = vld [vmem:[#allocation2 + $0x2c0] sm:$0x1]
    %v115 = vld [vmem:[#allocation2 + $0x2c8] sm:$0x1]
    %v116 = vld [vmem:[#allocation2 + $0x2d0] sm:$0x1]
    %v117 = vld [vmem:[#allocation2 + $0x2d8] sm:$0x1]
    %v118 = vld [vmem:[#allocation2 + $0x2e0] sm:$0x1]
    %v119 = vld [vmem:[#allocation2 + $0x2e8] sm:$0x1]
    %v120 = vld [vmem:[#allocation2 + $0x2f0] sm:$0x1]
    %v121 = vld [vmem:[#allocation2 + $0x2f8] sm:$0x1]
    %v122 = vld [vmem:[#allocation2 + $0x300] sm:$0x1]
    %v123 = vld [vmem:[#allocation2 + $0x308] sm:$0x1]
    %v124 = vld [vmem:[#allocation2 + $0x310] sm:$0x1]
    %v125 = vld [vmem:[#allocation2 + $0x318] sm:$0x1]
    %v126 = vld [vmem:[%s0] sm:$0xff]
    %v127 = vld [vmem:[%s0 + $0x8] sm:$0xff]
    %v128 = vld [vmem:[%s0 + $0x10] sm:$0xff]
    %v129 = vld [vmem:[%s0 + $0x18] sm:$0x1]
    %131 = vset.pattern.permute.xlu0 0
    %132 = vperm.xlu0 %131, %v126
    %v133 = vpop.permute.xlu0 %132
    %136 = vset.pattern.permute.xlu0 0
    %137 = vperm.xlu0 %136, %v127
    %v138 = vpop.permute.xlu0 %137
    %141 = vset.pattern.permute.xlu0 0
    %142 = vperm.xlu0 %141, %v128
    %v143 = vpop.permute.xlu0 %142
    %146 = vset.pattern.permute.xlu0 0
    %147 = vperm.xlu0 %146, %v129
    %v148 = vpop.permute.xlu0 %147
    %v150 = vmul.f32 %v26, %v133
    %v151 = vmul.f32 %v27, %v133
    %v152 = vmul.f32 %v28, %v133
    %v153 = vmul.f32 %v29, %v133
    %v154 = vmul.f32 %v30, %v133
    %v155 = vmul.f32 %v31, %v133
    %v156 = vmul.f32 %v32, %v133
    %v157 = vmul.f32 %v33, %v133
    %v158 = vmul.f32 %v34, %v133
    %v159 = vmul.f32 %v35, %v133
    %v160 = vmul.f32 %v36, %v133
    %v161 = vmul.f32 %v37, %v133
    %v162 = vmul.f32 %v38, %v133
    %v163 = vmul.f32 %v39, %v133
    %v164 = vmul.f32 %v40, %v133
    %v165 = vmul.f32 %v41, %v133
    %v166 = vmul.f32 %v42, %v133
    %v167 = vmul.f32 %v43, %v133
    %v168 = vmul.f32 %v44, %v133
    %v169 = vmul.f32 %v45, %v133
    %v170 = vmul.f32 %v46, %v133
    %v171 = vmul.f32 %v47, %v133
    %v172 = vmul.f32 %v48, %v133
    %v173 = vmul.f32 %v49, %v133
    %v174 = vmul.f32 %v50, %v133
    %v175 = vmul.f32 %v51, %v138
    %v176 = vmul.f32 %v52, %v138
    %v177 = vmul.f32 %v53, %v138
    %v178 = vmul.f32 %v54, %v138
    %v179 = vmul.f32 %v55, %v138
    %v180 = vmul.f32 %v56, %v138
    %v181 = vmul.f32 %v57, %v138
    %v182 = vmul.f32 %v58, %v138
    %v183 = vmul.f32 %v59, %v138
    %v184 = vmul.f32 %v60, %v138
    %v185 = vmul.f32 %v61, %v138
    %v186 = vmul.f32 %v62, %v138
    %v187 = vmul.f32 %v63, %v138
    %v188 = vmul.f32 %v64, %v138
    %v189 = vmul.f32 %v65, %v138
    %v190 = vmul.f32 %v66, %v138
    %v191 = vmul.f32 %v67, %v138
    %v192 = vmul.f32 %v68, %v138
    %v193 = vmul.f32 %v69, %v138
    %v194 = vmul.f32 %v70, %v138
    %v195 = vmul.f32 %v71, %v138
    %v196 = vmul.f32 %v72, %v138
    %v197 = vmul.f32 %v73, %v138
    %v198 = vmul.f32 %v74, %v138
    %v199 = vmul.f32 %v75, %v138
    %v200 = vmul.f32 %v76, %v143
    %v201 = vmul.f32 %v77, %v143
    %v202 = vmul.f32 %v78, %v143
    %v203 = vmul.f32 %v79, %v143
    %v204 = vmul.f32 %v80, %v143
    %v205 = vmul.f32 %v81, %v143
    %v206 = vmul.f32 %v82, %v143
    %v207 = vmul.f32 %v83, %v143
    %v208 = vmul.f32 %v84, %v143
    %v209 = vmul.f32 %v85, %v143
    %v210 = vmul.f32 %v86, %v143
    %v211 = vmul.f32 %v87, %v143
    %v212 = vmul.f32 %v88, %v143
    %v213 = vmul.f32 %v89, %v143
    %v214 = vmul.f32 %v90, %v143
    %v215 = vmul.f32 %v91, %v143
    %v216 = vmul.f32 %v92, %v143
    %v217 = vmul.f32 %v93, %v143
    %v218 = vmul.f32 %v94, %v143
    %v219 = vmul.f32 %v95, %v143
    %v220 = vmul.f32 %v96, %v143
    %v221 = vmul.f32 %v97, %v143
    %v222 = vmul.f32 %v98, %v143
    %v223 = vmul.f32 %v99, %v143
    %v224 = vmul.f32 %v100, %v143
    %v225 = vmul.f32 %v101, %v148
    %v226 = vmul.f32 %v102, %v148
    %v227 = vmul.f32 %v103, %v148
    %v228 = vmul.f32 %v104, %v148
    %v229 = vmul.f32 %v105, %v148
    %v230 = vmul.f32 %v106, %v148
    %v231 = vmul.f32 %v107, %v148
    %v232 = vmul.f32 %v108, %v148
    %v233 = vmul.f32 %v109, %v148
    %v234 = vmul.f32 %v110, %v148
    %v235 = vmul.f32 %v111, %v148
    %v236 = vmul.f32 %v112, %v148
    %v237 = vmul.f32 %v113, %v148
    %v238 = vmul.f32 %v114, %v148
    %v239 = vmul.f32 %v115, %v148
    %v240 = vmul.f32 %v116, %v148
    %v241 = vmul.f32 %v117, %v148
    %v242 = vmul.f32 %v118, %v148
    %v243 = vmul.f32 %v119, %v148
    %v244 = vmul.f32 %v120, %v148
    %v245 = vmul.f32 %v121, %v148
    %v246 = vmul.f32 %v122, %v148
    %v247 = vmul.f32 %v123, %v148
    %v248 = vmul.f32 %v124, %v148
    %v249 = vmul.f32 %v125, %v148
    %v250 = vadd.f32 %v150, %v175
    %v251 = vadd.f32 %v250, %v200
    %vm252 = vcmask 1040384
    %v253 = vsel %vm252, %v225, 0.0
    %v254 = vadd.f32 %v251, %v253
    %v255 = vrot.slane %v254, 4
    %v256 = vadd.f32 %v254, %v255
    %v257 = vrot.slane %v256, 2
    %v258 = vadd.f32 %v256, %v257
    %v259 = vrot.slane %v258, 1
    %v260 = vadd.f32 %v258, %v259
    %v261 = vadd.f32 %v151, %v176
    %v262 = vadd.f32 %v261, %v201
    %v263 = vsel %vm252, %v226, 0.0
    %v264 = vadd.f32 %v262, %v263
    %v265 = vrot.slane %v264, 4
    %v266 = vadd.f32 %v264, %v265
    %v267 = vrot.slane %v266, 2
    %v268 = vadd.f32 %v266, %v267
    %v269 = vrot.slane %v268, 1
    %v270 = vadd.f32 %v268, %v269
    %v271 = vadd.f32 %v152, %v177
    %v272 = vadd.f32 %v271, %v202
    %v273 = vsel %vm252, %v227, 0.0
    %v274 = vadd.f32 %v272, %v273
    %v275 = vrot.slane %v274, 4
    %v276 = vadd.f32 %v274, %v275
    %v277 = vrot.slane %v276, 2
    %v278 = vadd.f32 %v276, %v277
    %v279 = vrot.slane %v278, 1
    %v280 = vadd.f32 %v278, %v279
    %v281 = vadd.f32 %v153, %v178
    %v282 = vadd.f32 %v281, %v203
    %v283 = vsel %vm252, %v228, 0.0
    %v284 = vadd.f32 %v282, %v283
    %v285 = vrot.slane %v284, 4
    %v286 = vadd.f32 %v284, %v285
    %v287 = vrot.slane %v286, 2
    %v288 = vadd.f32 %v286, %v287
    %v289 = vrot.slane %v288, 1
    %v290 = vadd.f32 %v288, %v289
    %v291 = vadd.f32 %v154, %v179
    %v292 = vadd.f32 %v291, %v204
    %v293 = vsel %vm252, %v229, 0.0
    %v294 = vadd.f32 %v292, %v293
    %v295 = vrot.slane %v294, 4
    %v296 = vadd.f32 %v294, %v295
    %v297 = vrot.slane %v296, 2
    %v298 = vadd.f32 %v296, %v297
    %v299 = vrot.slane %v298, 1
    %v300 = vadd.f32 %v298, %v299
    %v301 = vadd.f32 %v155, %v180
    %v302 = vadd.f32 %v301, %v205
    %v303 = vsel %vm252, %v230, 0.0
    %v304 = vadd.f32 %v302, %v303
    %v305 = vrot.slane %v304, 4
    %v306 = vadd.f32 %v304, %v305
    %v307 = vrot.slane %v306, 2
    %v308 = vadd.f32 %v306, %v307
    %v309 = vrot.slane %v308, 1
    %v310 = vadd.f32 %v308, %v309
    %v311 = vadd.f32 %v156, %v181
    %v312 = vadd.f32 %v311, %v206
    %v313 = vsel %vm252, %v231, 0.0
    %v314 = vadd.f32 %v312, %v313
    %v315 = vrot.slane %v314, 4
    %v316 = vadd.f32 %v314, %v315
    %v317 = vrot.slane %v316, 2
    %v318 = vadd.f32 %v316, %v317
    %v319 = vrot.slane %v318, 1
    %v320 = vadd.f32 %v318, %v319
    %v321 = vadd.f32 %v157, %v182
    %v322 = vadd.f32 %v321, %v207
    %v323 = vsel %vm252, %v232, 0.0
    %v324 = vadd.f32 %v322, %v323
    %v325 = vrot.slane %v324, 4
    %v326 = vadd.f32 %v324, %v325
    %v327 = vrot.slane %v326, 2
    %v328 = vadd.f32 %v326, %v327
    %v329 = vrot.slane %v328, 1
    %v330 = vadd.f32 %v328, %v329
    %v331 = vadd.f32 %v158, %v183
    %v332 = vadd.f32 %v331, %v208
    %v333 = vsel %vm252, %v233, 0.0
    %v334 = vadd.f32 %v332, %v333
    %v335 = vrot.slane %v334, 4
    %v336 = vadd.f32 %v334, %v335
    %v337 = vrot.slane %v336, 2
    %v338 = vadd.f32 %v336, %v337
    %v339 = vrot.slane %v338, 1
    %v340 = vadd.f32 %v338, %v339
    %v341 = vadd.f32 %v159, %v184
    %v342 = vadd.f32 %v341, %v209
    %v343 = vsel %vm252, %v234, 0.0
    %v344 = vadd.f32 %v342, %v343
    %v345 = vrot.slane %v344, 4
    %v346 = vadd.f32 %v344, %v345
    %v347 = vrot.slane %v346, 2
    %v348 = vadd.f32 %v346, %v347
    %v349 = vrot.slane %v348, 1
    %v350 = vadd.f32 %v348, %v349
    %v351 = vadd.f32 %v160, %v185
    %v352 = vadd.f32 %v351, %v210
    %v353 = vsel %vm252, %v235, 0.0
    %v354 = vadd.f32 %v352, %v353
    %v355 = vrot.slane %v354, 4
    %v356 = vadd.f32 %v354, %v355
    %v357 = vrot.slane %v356, 2
    %v358 = vadd.f32 %v356, %v357
    %v359 = vrot.slane %v358, 1
    %v360 = vadd.f32 %v358, %v359
    %v361 = vadd.f32 %v161, %v186
    %v362 = vadd.f32 %v361, %v211
    %v363 = vsel %vm252, %v236, 0.0
    %v364 = vadd.f32 %v362, %v363
    %v365 = vrot.slane %v364, 4
    %v366 = vadd.f32 %v364, %v365
    %v367 = vrot.slane %v366, 2
    %v368 = vadd.f32 %v366, %v367
    %v369 = vrot.slane %v368, 1
    %v370 = vadd.f32 %v368, %v369
    %v371 = vadd.f32 %v162, %v187
    %v372 = vadd.f32 %v371, %v212
    %v373 = vsel %vm252, %v237, 0.0
    %v374 = vadd.f32 %v372, %v373
    %v375 = vrot.slane %v374, 4
    %v376 = vadd.f32 %v374, %v375
    %v377 = vrot.slane %v376, 2
    %v378 = vadd.f32 %v376, %v377
    %v379 = vrot.slane %v378, 1
    %v380 = vadd.f32 %v378, %v379
    %v381 = vadd.f32 %v163, %v188
    %v382 = vadd.f32 %v381, %v213
    %v383 = vsel %vm252, %v238, 0.0
    %v384 = vadd.f32 %v382, %v383
    %v385 = vrot.slane %v384, 4
    %v386 = vadd.f32 %v384, %v385
    %v387 = vrot.slane %v386, 2
    %v388 = vadd.f32 %v386, %v387
    %v389 = vrot.slane %v388, 1
    %v390 = vadd.f32 %v388, %v389
    %v391 = vadd.f32 %v164, %v189
    %v392 = vadd.f32 %v391, %v214
    %v393 = vsel %vm252, %v239, 0.0
    %v394 = vadd.f32 %v392, %v393
    %v395 = vrot.slane %v394, 4
    %v396 = vadd.f32 %v394, %v395
    %v397 = vrot.slane %v396, 2
    %v398 = vadd.f32 %v396, %v397
    %v399 = vrot.slane %v398, 1
    %v400 = vadd.f32 %v398, %v399
    %v401 = vadd.f32 %v165, %v190
    %v402 = vadd.f32 %v401, %v215
    %v403 = vsel %vm252, %v240, 0.0
    %v404 = vadd.f32 %v402, %v403
    %v405 = vrot.slane %v404, 4
    %v406 = vadd.f32 %v404, %v405
    %v407 = vrot.slane %v406, 2
    %v408 = vadd.f32 %v406, %v407
    %v409 = vrot.slane %v408, 1
    %v410 = vadd.f32 %v408, %v409
    %v411 = vadd.f32 %v166, %v191
    %v412 = vadd.f32 %v411, %v216
    %v413 = vsel %vm252, %v241, 0.0
    %v414 = vadd.f32 %v412, %v413
    %v415 = vrot.slane %v414, 4
    %v416 = vadd.f32 %v414, %v415
    %v417 = vrot.slane %v416, 2
    %v418 = vadd.f32 %v416, %v417
    %v419 = vrot.slane %v418, 1
    %v420 = vadd.f32 %v418, %v419
    %v421 = vadd.f32 %v167, %v192
    %v422 = vadd.f32 %v421, %v217
    %v423 = vsel %vm252, %v242, 0.0
    %v424 = vadd.f32 %v422, %v423
    %v425 = vrot.slane %v424, 4
    %v426 = vadd.f32 %v424, %v425
    %v427 = vrot.slane %v426, 2
    %v428 = vadd.f32 %v426, %v427
    %v429 = vrot.slane %v428, 1
    %v430 = vadd.f32 %v428, %v429
    %v431 = vadd.f32 %v168, %v193
    %v432 = vadd.f32 %v431, %v218
    %v433 = vsel %vm252, %v243, 0.0
    %v434 = vadd.f32 %v432, %v433
    %v435 = vrot.slane %v434, 4
    %v436 = vadd.f32 %v434, %v435
    %v437 = vrot.slane %v436, 2
    %v438 = vadd.f32 %v436, %v437
    %v439 = vrot.slane %v438, 1
    %v440 = vadd.f32 %v438, %v439
    %v441 = vadd.f32 %v169, %v194
    %v442 = vadd.f32 %v441, %v219
    %v443 = vsel %vm252, %v244, 0.0
    %v444 = vadd.f32 %v442, %v443
    %v445 = vrot.slane %v444, 4
    %v446 = vadd.f32 %v444, %v445
    %v447 = vrot.slane %v446, 2
    %v448 = vadd.f32 %v446, %v447
    %v449 = vrot.slane %v448, 1
    %v450 = vadd.f32 %v448, %v449
    %v451 = vadd.f32 %v170, %v195
    %v452 = vadd.f32 %v451, %v220
    %v453 = vsel %vm252, %v245, 0.0
    %v454 = vadd.f32 %v452, %v453
    %v455 = vrot.slane %v454, 4
    %v456 = vadd.f32 %v454, %v455
    %v457 = vrot.slane %v456, 2
    %v458 = vadd.f32 %v456, %v457
    %v459 = vrot.slane %v458, 1
    %v460 = vadd.f32 %v458, %v459
    %v461 = vadd.f32 %v171, %v196
    %v462 = vadd.f32 %v461, %v221
    %v463 = vsel %vm252, %v246, 0.0
    %v464 = vadd.f32 %v462, %v463
    %v465 = vrot.slane %v464, 4
    %v466 = vadd.f32 %v464, %v465
    %v467 = vrot.slane %v466, 2
    %v468 = vadd.f32 %v466, %v467
    %v469 = vrot.slane %v468, 1
    %v470 = vadd.f32 %v468, %v469
    %v471 = vadd.f32 %v172, %v197
    %v472 = vadd.f32 %v471, %v222
    %v473 = vsel %vm252, %v247, 0.0
    %v474 = vadd.f32 %v472, %v473
    %v475 = vrot.slane %v474, 4
    %v476 = vadd.f32 %v474, %v475
    %v477 = vrot.slane %v476, 2
    %v478 = vadd.f32 %v476, %v477
    %v479 = vrot.slane %v478, 1
    %v480 = vadd.f32 %v478, %v479
    %v481 = vadd.f32 %v173, %v198
    %v482 = vadd.f32 %v481, %v223
    %v483 = vsel %vm252, %v248, 0.0
    %v484 = vadd.f32 %v482, %v483
    %v485 = vrot.slane %v484, 4
    %v486 = vadd.f32 %v484, %v485
    %v487 = vrot.slane %v486, 2
    %v488 = vadd.f32 %v486, %v487
    %v489 = vrot.slane %v488, 1
    %v490 = vadd.f32 %v488, %v489
    %v491 = vadd.f32 %v174, %v199
    %v492 = vadd.f32 %v491, %v224
    %v493 = vsel %vm252, %v249, 0.0
    %v494 = vadd.f32 %v492, %v493
    %v495 = vrot.slane %v494, 4
    %v496 = vadd.f32 %v494, %v495
    %v497 = vrot.slane %v496, 2
    %v498 = vadd.f32 %v496, %v497
    %v499 = vrot.slane %v498, 1
    %v500 = vadd.f32 %v498, %v499
    %v526 = vcombine.low %v260, %v270
    %v527 = vcombine.low %v280, %v290
    %v528 = vcombine.low %v300, %v310
    %v529 = vcombine.low %v320, %v330
    %v531 = vunpack.c.l.s4 1966171168
    %v532 = vunpack.c.0.s8 %v531
    %v533 = vlaneseq
    %v534 = vshrl.u32 %v533, 7
    %v535 = vsub.s32 %v532, %v534
    %v536 = vrot.slane %v526, %v535
    %v538 = vunpack.c.l.s4 1966171168
    %v539 = vunpack.c.0.s8 %v538
    %v540 = vlaneseq
    %v541 = vshrl.u32 %v540, 7
    %v542 = vsub.s32 %v539, %v541
    %v543 = vrot.slane %v527, %v542
    %v545 = vunpack.c.l.s4 1966171168
    %v546 = vunpack.c.0.s8 %v545
    %v547 = vlaneseq
    %v548 = vshrl.u32 %v547, 7
    %v549 = vsub.s32 %v546, %v548
    %v550 = vrot.slane %v528, %v549
    %v552 = vunpack.c.l.s4 1966171168
    %v553 = vunpack.c.0.s8 %v552
    %v554 = vlaneseq
    %v555 = vshrl.u32 %v554, 7
    %v556 = vsub.s32 %v553, %v555
    %v557 = vrot.slane %v529, %v556
    %v558 = vcombine.low %v536, %v543
    %v559 = vcombine.low %v550, %v557
    %v561 = vunpack.c.l.s4 1966171168
    %v562 = vunpack.c.0.s8 %v561
    %v563 = vlaneseq
    %v564 = vshrl.u32 %v563, 7
    %v565 = vsub.s32 %v562, %v564
    %v566 = vrot.slane %v558, %v565
    %v568 = vunpack.c.l.s4 1966171168
    %v569 = vunpack.c.0.s8 %v568
    %v570 = vlaneseq
    %v571 = vshrl.u32 %v570, 7
    %v572 = vsub.s32 %v569, %v571
    %v573 = vrot.slane %v559, %v572
    %v574 = vcombine.low %v566, %v573
    %v575 = vcombine.low %v340, %v350
    %v576 = vcombine.low %v360, %v370
    %v577 = vcombine.low %v380, %v390
    %v578 = vcombine.low %v400, %v410
    %v580 = vunpack.c.l.s4 1966171168
    %v581 = vunpack.c.0.s8 %v580
    %v582 = vlaneseq
    %v583 = vshrl.u32 %v582, 7
    %v584 = vsub.s32 %v581, %v583
    %v585 = vrot.slane %v575, %v584
    %v587 = vunpack.c.l.s4 1966171168
    %v588 = vunpack.c.0.s8 %v587
    %v589 = vlaneseq
    %v590 = vshrl.u32 %v589, 7
    %v591 = vsub.s32 %v588, %v590
    %v592 = vrot.slane %v576, %v591
    %v594 = vunpack.c.l.s4 1966171168
    %v595 = vunpack.c.0.s8 %v594
    %v596 = vlaneseq
    %v597 = vshrl.u32 %v596, 7
    %v598 = vsub.s32 %v595, %v597
    %v599 = vrot.slane %v577, %v598
    %v601 = vunpack.c.l.s4 1966171168
    %v602 = vunpack.c.0.s8 %v601
    %v603 = vlaneseq
    %v604 = vshrl.u32 %v603, 7
    %v605 = vsub.s32 %v602, %v604
    %v606 = vrot.slane %v578, %v605
    %v607 = vcombine.low %v585, %v592
    %v608 = vcombine.low %v599, %v606
    %v610 = vunpack.c.l.s4 1966171168
    %v611 = vunpack.c.0.s8 %v610
    %v612 = vlaneseq
    %v613 = vshrl.u32 %v612, 7
    %v614 = vsub.s32 %v611, %v613
    %v615 = vrot.slane %v607, %v614
    %v617 = vunpack.c.l.s4 1966171168
    %v618 = vunpack.c.0.s8 %v617
    %v619 = vlaneseq
    %v620 = vshrl.u32 %v619, 7
    %v621 = vsub.s32 %v618, %v620
    %v622 = vrot.slane %v608, %v621
    %v623 = vcombine.low %v615, %v622
    %v624 = vcombine.low %v420, %v430
    %v625 = vcombine.low %v440, %v450
    %v626 = vcombine.low %v460, %v470
    %v627 = vcombine.low %v480, %v490
    %v629 = vunpack.c.l.s4 1966171168
    %v630 = vunpack.c.0.s8 %v629
    %v631 = vlaneseq
    %v632 = vshrl.u32 %v631, 7
    %v633 = vsub.s32 %v630, %v632
    %v634 = vrot.slane %v624, %v633
    %v636 = vunpack.c.l.s4 1966171168
    %v637 = vunpack.c.0.s8 %v636
    %v638 = vlaneseq
    %v639 = vshrl.u32 %v638, 7
    %v640 = vsub.s32 %v637, %v639
    %v641 = vrot.slane %v625, %v640
    %v643 = vunpack.c.l.s4 1966171168
    %v644 = vunpack.c.0.s8 %v643
    %v645 = vlaneseq
    %v646 = vshrl.u32 %v645, 7
    %v647 = vsub.s32 %v644, %v646
    %v648 = vrot.slane %v626, %v647
    %v650 = vunpack.c.l.s4 1966171168
    %v651 = vunpack.c.0.s8 %v650
    %v652 = vlaneseq
    %v653 = vshrl.u32 %v652, 7
    %v654 = vsub.s32 %v651, %v653
    %v655 = vrot.slane %v627, %v654
    %v656 = vcombine.low %v634, %v641
    %v657 = vcombine.low %v648, %v655
    %v659 = vunpack.c.l.s4 1966171168
    %v660 = vunpack.c.0.s8 %v659
    %v661 = vlaneseq
    %v662 = vshrl.u32 %v661, 7
    %v663 = vsub.s32 %v660, %v662
    %v664 = vrot.slane %v656, %v663
    %v666 = vunpack.c.l.s4 1966171168
    %v667 = vunpack.c.0.s8 %v666
    %v668 = vlaneseq
    %v669 = vshrl.u32 %v668, 7
    %v670 = vsub.s32 %v667, %v669
    %v671 = vrot.slane %v657, %v670
    %v672 = vcombine.low %v664, %v671
    %v674 = vunpack.c.l.s4 1966171168
    %v675 = vunpack.c.0.s8 %v674
    %v676 = vlaneseq
    %v677 = vshrl.u32 %v676, 7
    %v678 = vsub.s32 %v675, %v677
    %v679 = vrot.slane %v500, %v678
    %v681 = vunpack.c.l.s4 1966171168
    %v682 = vunpack.c.0.s8 %v681
    %v683 = vlaneseq
    %v684 = vshrl.u32 %v683, 7
    %v685 = vsub.s32 %v682, %v684
    %v686 = vrot.slane %v679, %v685
    %691 = vst [vmem:[#allocation5] sm:$0xff] %v574
    %692 = vst [vmem:[#allocation5 + $0x8] sm:$0xff] %v623
    %693 = vst [vmem:[#allocation5 + $0x10] sm:$0xff] %v672
    %v694 = vlaneseq
    %vm695 = vcmp.ge.s32.totalorder %v694, 0
    %vm696 = vcmp.lt.s32.totalorder %v694, 128
    %vm697 = vmand %vm695, %vm696
    %698 = vst.msk [vmem:[#allocation5 + $0x18] sm:$0x1] %vm697, %v686
    // Predicated region
    $region14: #{tpu_custom_call.1} parent=1 // pred_check
      _
    $region15: #{tpu_custom_call.1} parent=1 // pred_check_branch
      %700 = sbr.rel (0) target = $region17
    $region16: #{tpu_custom_call.1} parent=1 // pred_region
      %s702 = ssub.s32 400, 400
      %703 = vsyncadd [#allocation4], %s702
      %s705 = sshll.u32 [#allocation5], 4
      %s706 = int_to_ptr.vmem [resolvable:$true] %s705
      %708 = dma.vmem_to_hbm [thread:$0]  %s706, 400, %s2, [#allocation4]
    $region17: #{tpu_custom_call.1} parent=1 // pred_fallthru
      _
    // Predicated region
    $region18: #{tpu_custom_call.1} parent=1 // pred_check
      _
    $region19: #{tpu_custom_call.1} parent=1 // pred_check_branch
      %710 = sbr.rel (0) target = $region21
    $region20: #{tpu_custom_call.1} parent=1 // pred_region
      %711 = dma.done [#allocation4], 400
    $region21: #{tpu_custom_call.1} parent=1 // pred_fallthru
      _
    %712 = vsyncpa [#allocation3], 1
    %713 = vsyncpa [#allocation4], 1

</llo_original>
